<compile_context>
chip_gen: v6e
topology: v6e:2x2x1
jax: 0.10.0
libtpu: 0.0.40
codegen_flags: <defaults>
</compile_context>

<pallas_src>
import jax
import jax.numpy as jnp
import numpy as np
from jax.experimental import pallas as pl
from jax.experimental.pallas import tpu as pltpu


# ---------------------------------------------------------------------------
# Fused kernel: per_batch_transform + per_sample_transform
#   sharpen(softmax(x @ W + b)) == softmax(x @ (2W) + 2b)   (2x folded into params)
# ---------------------------------------------------------------------------
def _fused_post_process_kernel(x_ref, w_ref, b_ref, o_ref):
    # bf16 x bf16 matmul on the MXU with f32 accumulation
    logits = jnp.dot(x_ref[...], w_ref[...], preferred_element_type=jnp.float32)
    logits = logits + b_ref[...]                 # (M, C) + (1, C), f32
    m = jnp.max(logits, axis=-1, keepdims=True)
    e = jnp.exp(logits - m)
    s = jnp.sum(e, axis=-1, keepdims=True)
    # approx=True -> EUP vrcp (its own VLIW slot; keeps the VALU slot clear)
    o_ref[...] = (e * pl.reciprocal(s, approx=True)).astype(o_ref.dtype)


_SINGLE_TILE_MAX_ROWS = 1024  # below this the whole problem is one small VMEM tile


def _round_up(n: int, m: int) -> int:
    return ((n + m - 1) // m) * m


def fused_post_process(x, w2, b2, *, block_m: int = 2048, out_dtype=jnp.bfloat16):
    """softmax(x @ W2 + b2) over the class axis == sharpen(softmax(x @ W + b))."""
    rows, Hn = x.shape
    _, Cn = w2.shape
    x = x.astype(w2.dtype)  # bf16 HBM reads; accumulation stays f32 inside the kernel

    if rows <= _SINGLE_TILE_MAX_ROWS:
        # Entire workload is one (rows, Cn) tile: single invocation, no grid
        # bookkeeping, one unmasked lane-dense full-tile store.
        return pl.pallas_call(
            _fused_post_process_kernel,
            out_shape=jax.ShapeDtypeStruct((rows, Cn), out_dtype),
            in_specs=[
                pl.BlockSpec((rows, Hn), lambda: (0, 0)),
                pl.BlockSpec((Hn, Cn), lambda: (0, 0)),
                pl.BlockSpec((1, Cn), lambda: (0, 0)),
            ],
            out_specs=pl.BlockSpec((rows, Cn), lambda: (0, 0)),
        )(x, w2, b2)

    # Batched path (many 8-row batches stacked into one call): tile the row axis.
    # Force >= 2 blocks so "parallel" can shard tiles across both v7x TensorCores.
    # Padded tail rows of the last tile go through exp on stale VMEM data; the
    # max-subtraction keeps that finite and those output rows are masked on store,
    # so valid rows are unaffected.
    bm = min(block_m, _round_up(pl.cdiv(rows, 2), 8))
    grid = (pl.cdiv(rows, bm),)
    return pl.pallas_call(
        _fused_post_process_kernel,
        out_shape=jax.ShapeDtypeStruct((rows, Cn), out_dtype),
        grid=grid,
        in_specs=[
            pl.BlockSpec((bm, Hn), lambda i: (i, 0)),
            pl.BlockSpec((Hn, Cn), lambda i: (0, 0)),
            pl.BlockSpec((1, Cn), lambda i: (0, 0)),
        ],
        out_specs=pl.BlockSpec((bm, Cn), lambda i: (i, 0)),
        compiler_params=pltpu.CompilerParams(dimension_semantics=("parallel",)),
    )(x, w2, b2)


# ---------------------------------------------------------------------------
# Parameter prep (init-time, one-off) and the _PostProcessor.forward equivalent
# ---------------------------------------------------------------------------
def prepare_post_processor_params(w, b):
    """One-time constant fold: sharpen factor 2 folded into W/b, W cast to bf16
    for the HBM boundary (done at init, NOT per call)."""
    w2 = (2.0 * w).astype(jnp.bfloat16)
    b2 = (2.0 * b).astype(jnp.float32).reshape(1, -1)
    return w2, b2


@jax.jit
def post_processor_batch_transform(batch, w2, b2):
    # per_batch_transform + per_sample_transform, fused into one pallas_call.
    # Returns the stacked (B, C) array; the uncollate happens on the host.
    return fused_post_process(batch, w2, b2)


def post_processor_forward(batch, w2, b2):
    """_PostProcessor.forward with save_fn=None: returns the per-sample list."""
    stacked = post_processor_batch_transform(batch, w2, b2)
    # uncollate_fn: ONE device->host transfer, then zero-copy numpy row views
    # (each sample is a (C,) vector, matching the PyTorch per-sample shape).
    host = np.asarray(jax.block_until_ready(stacked))
    final_preds = [host[i] for i in range(host.shape[0])]
    # TODO(synk): save_fn / save_per_sample are host-side file-I/O side effects with no Pallas equivalent.
    return final_preds


if __name__ == "__main__":
    B, H, C = 8, 32, 128  # batch=8, hidden=32, classes=128
    key = jax.random.PRNGKey(0)
    kx, kw, kb = jax.random.split(key, 3)
    x = jax.random.normal(kx, (B, H), dtype=jnp.float32)
    w = jax.random.normal(kw, (H, C), dtype=jnp.float32) * 0.1
    b = jax.random.normal(kb, (C,), dtype=jnp.float32) * 0.01

    # init-time parameter prep (2x sharpen fold + bf16 cast, done once)
    w2, b2 = prepare_post_processor_params(w, b)

    # Reference: the original two-stage formulation (softmax then sharpen), with
    # x / W quantized to bf16 the same way the kernel's HBM boundary quantizes them,
    # so the check isolates kernel error (bf16 output rounding + approx reciprocal).
    def reference(xq, wq, bias):
        p = jax.nn.softmax(xq @ wq + bias, axis=-1)
        return (p ** 2) / jnp.sum(p ** 2, axis=-1, keepdims=True)

    wq = w.astype(jnp.bfloat16).astype(jnp.float32)

    # --- production small-batch case (B=8): single-tile, launch-bound path ---
    preds = post_processor_forward(x, w2, b2)
    got = jnp.asarray(np.stack(preds)).astype(jnp.float32)
    assert got.shape == (B, C)
    xq = x.astype(jnp.bfloat16).astype(jnp.float32)
    ref = reference(xq, wq, b)
    assert jnp.allclose(got, ref, atol=1e-2, rtol=1e-2), "small-batch mismatch vs reference"

    # --- batched path: many 8-row batches stacked into a single pallas_call ---
    BIG = 4096
    xb = jax.random.normal(jax.random.fold_in(kx, 1), (BIG, H), dtype=jnp.float32)
    big = jax.block_until_ready(post_processor_batch_transform(xb, w2, b2))
    xbq = xb.astype(jnp.bfloat16).astype(jnp.float32)
    ref_big = reference(xbq, wq, b)
    assert jnp.allclose(big.astype(jnp.float32), ref_big, atol=1e-2, rtol=1e-2), \
        "batched mismatch vs reference"

    print("KERNEL_OK")
</pallas_src>

<mosaic_0001>
module attributes {stable_mosaic.version = 11 : i64} {
  func.func @_fused_post_process_kernel(%arg0: memref<8x32xbf16, #tpu.memory_space<vmem>>, %arg1: memref<32x128xbf16, #tpu.memory_space<vmem>>, %arg2: memref<1x128xf32, #tpu.memory_space<vmem>>, %arg3: memref<8x128xbf16, #tpu.memory_space<vmem>>) attributes {dimension_semantics = [], scalar_prefetch = 0 : i64, scratch_operands = 0 : i64, tpu.core_type = #tpu.core_type<tc>} {
    %c0 = arith.constant 0 : index
    %c0_0 = arith.constant 0 : index
    %0 = vector.load %arg0[%c0, %c0_0] : memref<8x32xbf16, #tpu.memory_space<vmem>>, vector<8x32xbf16>
    %c0_1 = arith.constant 0 : index
    %c0_2 = arith.constant 0 : index
    %1 = vector.load %arg1[%c0_1, %c0_2] : memref<32x128xbf16, #tpu.memory_space<vmem>>, vector<32x128xbf16>
    %cst = arith.constant dense<0.000000e+00> : vector<8x128xf32>
    %2 = tpu.matmul %0, %1, %cst {dimension_numbers = #tpu.dot_dimension_numbers<[1], [0], [0], [1], [0, 0, 1, 1], [], []>} : vector<8x32xbf16>, vector<32x128xbf16>, vector<8x128xf32> -> vector<8x128xf32>
    %c0_3 = arith.constant 0 : index
    %c0_4 = arith.constant 0 : index
    %3 = vector.load %arg2[%c0_3, %c0_4] : memref<1x128xf32, #tpu.memory_space<vmem>>, vector<1x128xf32>
    %4 = vector.broadcast %3 : vector<1x128xf32> to vector<8x128xf32>
    %5 = arith.addf %2, %4 : vector<8x128xf32>
    %cst_5 = arith.constant dense<0xFF800000> : vector<8xf32>
    %6 = vector.multi_reduction <maximumf>, %5, %cst_5 [1] : vector<8x128xf32> to vector<8xf32>
    %7 = vector.shape_cast %6 : vector<8xf32> to vector<8x1xf32>
    %8 = vector.broadcast %7 : vector<8x1xf32> to vector<8x128xf32>
    %9 = arith.subf %5, %8 : vector<8x128xf32>
    %10 = math.exp %9 : vector<8x128xf32>
    %cst_6 = arith.constant dense<0.000000e+00> : vector<8xf32>
    %11 = vector.multi_reduction <add>, %10, %cst_6 [1] : vector<8x128xf32> to vector<8xf32>
    %12 = vector.shape_cast %11 : vector<8xf32> to vector<8x1xf32>
    %13 = tpu.reciprocal %12 {approx = true} : vector<8x1xf32> -> vector<8x1xf32>
    %14 = vector.broadcast %13 : vector<8x1xf32> to vector<8x128xf32>
    %15 = arith.mulf %10, %14 : vector<8x128xf32>
    %16 = arith.truncf %15 : vector<8x128xf32> to vector<8x128xbf16>
    %c0_7 = arith.constant 0 : index
    %c0_8 = arith.constant 0 : index
    %17 = vector.load %arg3[%c0_7, %c0_8] : memref<8x128xbf16, #tpu.memory_space<vmem>>, vector<8x128xbf16>
    tpu.vector_store %arg3[%c0_7, %c0_8], %16 {strides = array<i32>} : memref<8x128xbf16, #tpu.memory_space<vmem>>, vector<8x128xbf16>,
    return
  }
}

</mosaic_0001>

<llo_original>
// kernel: post_processor_batch_transform.1
$region0: #{post_processor_batch_transform.1}
  #allocation0 [shape = 'u32[]', space=smem, size = 0x4, offset = 0x4, fixed_abs, tag = 'smem constant byte address 0x4 - core index']
  #allocation1 [shape = 'u32[144,128]{1,0:T(1,128)}', space=vmem, size = 0x12000, scoped, tag = 'internal scratch']
  %s0 = inlined_call_operand.vmem [shape: bf16[8,32], index: 0, kind: input, shape index: {}]
  %s1 = inlined_call_operand.hbm [shape: bf16[32,128], index: 1, kind: input, shape index: {}]
  %s2 = inlined_call_operand.vmem [shape: f32[1,128], index: 2, kind: input, shape index: {}]
  %s3 = inlined_call_operand.hbm [shape: bf16[8,128], index: 3, kind: output, shape index: {}]
  %s4 = sld [smem:[#allocation0]]
  $region26: #{post_processor_batch_transform.1} parent=0
    _
  %s6 = ssub.s32 1, %s4
  %s7 = scalar_select 0, %s6, %s4
  $region1: #{post_processor_batch_transform.1} parent=0
    #allocation2 [shape = 'u8[8192]{0}', space=vmem, size = 0x2000, scoped, tag = 'input window, operand 1, single buffered']
    #allocation3 [shape = 's32[1]{0}', space=sflag, size = 0x4, scoped, tag = 'scoped memory for post_processor_batch_transform.1']
    #allocation4 [shape = 's32[1]{0}', space=sflag, size = 0x4, scoped, tag = 'scoped memory for post_processor_batch_transform.1']
    #allocation5 [shape = 'u8[2048]{0}', space=vmem, size = 0x800, scoped, tag = 'output window, operand 0, single buffered']
    %8 = vsyncpa [#allocation3], 0
    %9 = vsyncpa [#allocation4], 0
    // Predicated region
    $region2: #{post_processor_batch_transform.1} parent=1 // pred_check
      _
    $region3: #{post_processor_batch_transform.1} parent=1 // pred_check_branch
      %11 = sbr.rel (0) target = $region5
    $region4: #{post_processor_batch_transform.1} parent=1 // pred_region
      _
    $region5: #{post_processor_batch_transform.1} parent=1 // pred_fallthru
      _
    // Predicated region
    $region6: #{post_processor_batch_transform.1} parent=1 // pred_check
      _
    $region7: #{post_processor_batch_transform.1} parent=1 // pred_check_branch
      %13 = sbr.rel (0) target = $region9
    $region8: #{post_processor_batch_transform.1} parent=1 // pred_region
      %s15 = ssub.s32 256, 256
      %16 = vsyncadd [#allocation3], %s15
      %s17 = sshll.u32 [#allocation2], 4
      %s18 = int_to_ptr.vmem [resolvable:$true] %s17
      %23 = dma.hbm_to_vmem [thread:$0]  %s1, 256, %s18, [#allocation3], 64, 64, 4
    $region9: #{post_processor_batch_transform.1} parent=1 // pred_fallthru
      _
    // Predicated region
    $region10: #{post_processor_batch_transform.1} parent=1 // pred_check
      _
    $region11: #{post_processor_batch_transform.1} parent=1 // pred_check_branch
      %25 = sbr.rel (0) target = $region13
    $region12: #{post_processor_batch_transform.1} parent=1 // pred_region
      _
    $region13: #{post_processor_batch_transform.1} parent=1 // pred_fallthru
      _
    // Predicated region
    $region14: #{post_processor_batch_transform.1} parent=1 // pred_check
      _
    $region15: #{post_processor_batch_transform.1} parent=1 // pred_check_branch
      %27 = sbr.rel (0) target = $region17
    $region16: #{post_processor_batch_transform.1} parent=1 // pred_region
      %28 = dma.done [#allocation3], 256
    $region17: #{post_processor_batch_transform.1} parent=1 // pred_fallthru
      _
    %v30 = vld [vmem:[%s0] sm:$0xf]
    %v31 = vld [vmem:[#allocation2] sm:$0xf]
    %v32 = vld [vmem:[#allocation2 + $0x4] sm:$0xf]
    %v33 = vld [vmem:[#allocation2 + $0x8] sm:$0xf]
    %v34 = vld [vmem:[#allocation2 + $0xc] sm:$0xf]
    %v35 = vld [vmem:[%s2] sm:$0x1]
    %v37 = vlaneseq
    %v38 = vshrl.u32 %v37, 7
    %v39 = vsub.s32 0, %v38
    %v40 = vrot.slane %v35, %v39
    %v46 = vunpack.c.l.b16 %v31
    %v47 = vunpack.c.l.b16 %v32
    %v48 = vunpack.c.l.b16 %v33
    %v49 = vunpack.c.l.b16 %v34
    %v50 = vpack.c.b16 %v47, %v46
    %v51 = vpack.c.b16 %v49, %v48
    %vm54 = vcmask 261120
    %v56 = vsel %vm54, %v30, 0
    %58 = vmatprep.subr.bf16.mxu0 0
    %59 = vmatpush1.bf16.msra.mxu0 0
    %60 = vmatprep.subr.bf16.mxu0 0
    %61 = vmatpush1.bf16.msra.mxu0 0
    %62 = vmatprep.subr.bf16.mxu0 0
    %63 = vmatpush1.bf16.msra.mxu0 0
    %64 = vmatprep.subr.bf16.mxu0 0
    %65 = vmatpush1.bf16.msra.mxu0 0
    %66 = vmatprep.subr.bf16.mxu0 0
    %67 = vmatpush1.bf16.msra.mxu0 0
    %68 = vmatprep.subr.bf16.mxu0 0
    %69 = vmatpush1.bf16.msra.mxu0 0
    %70 = vmatprep.subr.bf16.mxu0 0
    %71 = vmatpush1.bf16.msra.mxu0 %v51
    %72 = vmatprep.subr.bf16.mxu0 0
    %73 = vmatpush1.bf16.msra.mxu0 %v50
    %74 = vmatprep.subr.bf16.mxu0 0
    %75 = vmatpush2.bf16.msra.mxu0 0
    %76 = vmatprep.subr.bf16.mxu0 0
    %77 = vmatpush2.bf16.msra.mxu0 0
    %78 = vmatprep.subr.bf16.mxu0 0
    %79 = vmatpush2.bf16.msra.mxu0 0
    %80 = vmatprep.subr.bf16.mxu0 0
    %81 = vmatpush2.bf16.msra.mxu0 0
    %82 = vmatprep.subr.bf16.mxu0 0
    %83 = vmatpush2.bf16.msra.mxu0 0
    %84 = vmatprep.subr.bf16.mxu0 0
    %85 = vmatpush2.bf16.msra.mxu0 0
    %86 = vmatprep.subr.bf16.mxu0 0
    %87 = vmatpush2.bf16.msra.mxu0 0
    %88 = vmatprep.subr.bf16.mxu0 0
    %89 = vmatpush2.bf16.msra.mxu0 0
    %90 = vmatprep.mubr.bf16.mxu0 0
    %91 = vmatmul.mubr.bf16.gmra.mxu0 %v56
    %v92 = vpop.f32.mrf.mxu0
    %v93 = vadd.f32 %v40, %v92
    %v94 = vpop.f32.mrf.mxu0
    %v95 = vpop.f32.mrf.mxu0
    %v96 = vpop.f32.mrf.mxu0
    %97 = vdwg.mxu0
    %98 = vmax.xlane.f32.xlu0 %v93
    %v99 = vpop.xlane.xlu0 %98
    %v100 = vsub.f32 %v93, %v99
    %v101 = vmul.f32 %v100, 1.442695
    %v102 = vpow.pop %v101
    %103 = vadd.xlane.f32.xlu0 %v102
    %v104 = vpop.xlane.xlu0 %103
    %v105 = vrcp.pop %v104
    %v106 = vmul.f32 %v102, %v105
    %v107 = vpack.c.bf16 %v106, %v106
    %108 = vst [vmem:[#allocation5] sm:$0xf] %v107
    // Predicated region
    $region18: #{post_processor_batch_transform.1} parent=1 // pred_check
      _
    $region19: #{post_processor_batch_transform.1} parent=1 // pred_check_branch
      %110 = sbr.rel (0) target = $region21
    $region20: #{post_processor_batch_transform.1} parent=1 // pred_region
      %s112 = ssub.s32 64, 64
      %113 = vsyncadd [#allocation4], %s112
      %s115 = sshll.u32 [#allocation5], 4
      %s116 = int_to_ptr.vmem [resolvable:$true] %s115
      %118 = dma.vmem_to_hbm [thread:$0]  %s116, 64, %s3, [#allocation4]
    $region21: #{post_processor_batch_transform.1} parent=1 // pred_fallthru
      _
    // Predicated region
    $region22: #{post_processor_batch_transform.1} parent=1 // pred_check
      _
    $region23: #{post_processor_batch_transform.1} parent=1 // pred_check_branch
      %120 = sbr.rel (0) target = $region25
    $region24: #{post_processor_batch_transform.1} parent=1 // pred_region
      %121 = dma.done [#allocation4], 64
    $region25: #{post_processor_batch_transform.1} parent=1 // pred_fallthru
      _
    %122 = vsyncpa [#allocation3], 1
    %123 = vsyncpa [#allocation4], 1

</llo_original>
